<compile_context>
chip_gen: v5e
topology: v5e:2x2
jax: 0.10.0
libtpu: 0.0.40
codegen_flags: <defaults>
</compile_context>

<pallas_src>
import jax
import jax.numpy as jnp
from jax.experimental import pallas as pl
from jax.experimental.pallas import tpu as pltpu


_LANE = 128
_SUBLANE = 8
_TARGET_SLAB_BYTES = 2 * 1024 * 1024  # per feat/out slab; ample pipelining headroom


def _noise_injection_kernel(w_ref, feat_ref, noise_ref, out_ref):
    # feat_ref / out_ref: (c_tile, s_tile); noise_ref: (1, s_tile); w_ref: (1,) f32 SMEM.
    w = w_ref[0]
    out_ref[...] = (feat_ref[...] + w * noise_ref[...]).astype(out_ref.dtype)


def _largest_divisor_tile(dim, unit, max_elems):
    """Largest multiple of `unit` that divides `dim` and is <= max(max_elems, unit).

    `dim` must be a positive multiple of `unit`.
    """
    cap_units = max(max_elems, unit) // unit
    n_units = dim // unit
    best = 1
    d = 1
    while d * d <= n_units:
        if n_units % d == 0:
            for cand in (d, n_units // d):
                if cand <= cap_units and cand > best:
                    best = cand
        d += 1
    return best * unit


def noise_injection(feat, weight, noise=None, *, key=None):
    """Pallas equivalent of NoiseInjection.forward: feat + weight * noise.

    feat:   (B, C, H, W)
    weight: scalar parameter (shape () or (1,))
    noise:  optional (B, 1, H, W); if None, sampled ~ N(0, 1) with `key`.
    """
    B, C, H, W = feat.shape
    if noise is None:
        if key is None:
            key = jax.random.PRNGKey(0)
        # TODO(synk): generate noise in-kernel via pltpu.prng_seed +
        # pltpu.stateful_normal to skip one HBM round-trip for the noise plane.
        noise = jax.random.normal(key, (B, 1, H, W), dtype=feat.dtype)
    noise = noise.astype(feat.dtype)

    hw = H * W
    itemsize = jnp.dtype(feat.dtype).itemsize

    # (B, C, H, W) -> (B, C, H*W): collapsing trailing contiguous dims is free.
    feat2 = feat.reshape(B, C, hw)
    noise2 = noise.reshape(B, 1, hw)

    # ---- Tile selection: no padding, no extra HBM copies --------------------
    # Spatial tile: a lane-dense multiple of 128 that exactly divides H*W when
    # possible; otherwise a full-extent last axis (block dim == array dim).
    if hw % _LANE == 0:
        s_budget = max(_LANE, _TARGET_SLAB_BYTES // max(1, C * itemsize))
        s_tile = _largest_divisor_tile(hw, _LANE, s_budget)
    else:
        s_tile = hw  # full-dim block avoids pad/slice round-trips entirely

    # Channel tile: full C if the slab fits the budget (or C cannot be split
    # into sublane-aligned pieces); else the largest multiple-of-8 divisor.
    if C * s_tile * itemsize <= _TARGET_SLAB_BYTES or C % _SUBLANE != 0:
        c_tile = C
    else:
        c_budget = max(_SUBLANE, _TARGET_SLAB_BYTES // max(1, s_tile * itemsize))
        c_tile = _largest_divisor_tile(C, _SUBLANE, c_budget)

    n_s = hw // s_tile
    n_c = C // c_tile

    w32 = jnp.asarray(weight).reshape((1,)).astype(jnp.float32)

    # Double-buffered VMEM need: 2 x (feat_in + out + noise) slabs, plus headroom.
    slab_bytes = c_tile * s_tile * itemsize
    noise_bytes = s_tile * itemsize
    needed = 2 * (2 * slab_bytes + noise_bytes)
    vmem_limit = int(min(max(2 * needed + (4 << 20), 32 << 20), 64 << 20))

    out2 = pl.pallas_call(
        _noise_injection_kernel,
        out_shape=jax.ShapeDtypeStruct((B, C, hw), feat.dtype),
        grid_spec=pltpu.PrefetchScalarGridSpec(
            num_scalar_prefetch=0,
            grid=(B, n_c, n_s),
            in_specs=[
                # Scalar weight lives in SMEM, identical for every grid step.
                pl.BlockSpec(memory_space=pltpu.SMEM),
                # (c_tile, s_tile) slab of feat; batch dim squeezed away.
                pl.BlockSpec((pl.Squeezed(), c_tile, s_tile),
                             lambda b, c, s: (b, c, s)),
                # Single-channel (1, s_tile) noise row; broadcast over C in-kernel.
                pl.BlockSpec((pl.Squeezed(), 1, s_tile),
                             lambda b, c, s: (b, 0, s)),
            ],
            out_specs=pl.BlockSpec((pl.Squeezed(), c_tile, s_tile),
                                   lambda b, c, s: (b, c, s)),
        ),
        compiler_params=pltpu.CompilerParams(
            # All axes independent -> shardable across v7x's two TensorCores.
            dimension_semantics=("parallel", "parallel", "parallel"),
            vmem_limit_bytes=vmem_limit,
        ),
    )(w32, feat2, noise2)

    return out2.reshape(B, C, H, W)


if __name__ == "__main__":
    key = jax.random.PRNGKey(0)
    k_feat, k_noise, k_feat2, k_noise2 = jax.random.split(key, 4)

    # Main shapes: H*W = 256 (lane-dense multiple of 128).
    B, C, H, W = 2, 4, 16, 16
    feat = jax.random.normal(k_feat, (B, C, H, W), dtype=jnp.float32)
    noise = jax.random.normal(k_noise, (B, 1, H, W), dtype=jnp.float32)

    # Parameter init matches the module: nn.Parameter(torch.zeros(1)).
    weight = jnp.zeros((1,), dtype=jnp.float32)

    out = noise_injection(feat, weight, noise)
    jax.block_until_ready(out)
    ref = feat + weight[0] * noise
    assert jnp.allclose(out, ref, atol=1e-6), "mismatch (zero weight)"

    # Nonzero weight exercises the broadcast-over-C path.
    weight_nz = jnp.asarray([0.37], dtype=jnp.float32)
    out_nz = noise_injection(feat, weight_nz, noise)
    jax.block_until_ready(out_nz)
    ref_nz = feat + weight_nz[0] * noise
    assert jnp.allclose(out_nz, ref_nz, atol=1e-5), "mismatch (nonzero weight)"

    # noise=None path (zero weight -> identity regardless of sampled noise).
    out_none = noise_injection(feat, weight, None, key=k_noise)
    jax.block_until_ready(out_none)
    assert jnp.allclose(out_none, feat, atol=1e-6), "mismatch (noise=None, zero weight)"

    # Non-128-multiple spatial size exercises the full-extent (no-pad) path
    # (H*W = 100, C = 3): block dims equal the full array dims.
    B2, C2, H2, W2 = 2, 3, 10, 10
    feat_b = jax.random.normal(k_feat2, (B2, C2, H2, W2), dtype=jnp.float32)
    noise_b = jax.random.normal(k_noise2, (B2, 1, H2, W2), dtype=jnp.float32)
    out_b = noise_injection(feat_b, weight_nz, noise_b)
    jax.block_until_ready(out_b)
    ref_b = feat_b + weight_nz[0] * noise_b
    assert jnp.allclose(out_b, ref_b, atol=1e-5), "mismatch (full-extent path)"

    print("KERNEL_OK")
</pallas_src>

<mosaic_0001>
module attributes {stable_mosaic.version = 11 : i64} {
  func.func @_noise_injection_kernel(%arg0: i32, %arg1: i32, %arg2: i32, %arg3: memref<1xf32, #tpu.memory_space<smem>>, %arg4: memref<1x4x256xf32, #tpu.memory_space<vmem>>, %arg5: memref<1x1x256xf32, #tpu.memory_space<vmem>>, %arg6: memref<1x4x256xf32, #tpu.memory_space<vmem>>) attributes {dimension_semantics = [#tpu.dimension_semantics<parallel>, #tpu.dimension_semantics<parallel>, #tpu.dimension_semantics<parallel>], iteration_bounds = array<i64: 2, 1, 1>, scalar_prefetch = 0 : i64, scratch_operands = 0 : i64, tpu.core_type = #tpu.core_type<tc>, window_params = [{transform_indices = @transform_0, window_bounds = array<i64: 1>}, {transform_indices = @transform_1, window_bounds = array<i64: 1, 4, 256>}, {transform_indices = @transform_2, window_bounds = array<i64: 1, 1, 256>}, {transform_indices = @transform_3, window_bounds = array<i64: 1, 4, 256>}]} {
    %c0 = arith.constant 0 : index
    %0 = memref.load %arg3[%c0] : memref<1xf32, #tpu.memory_space<smem>>
    %c0_0 = arith.constant 0 : index
    %c0_1 = arith.constant 0 : index
    %c0_2 = arith.constant 0 : index
    %1 = vector.load %arg4[%c0_0, %c0_1, %c0_2] : memref<1x4x256xf32, #tpu.memory_space<vmem>>, vector<1x4x256xf32>
    %2 = vector.shape_cast %1 : vector<1x4x256xf32> to vector<4x256xf32>
    %c0_3 = arith.constant 0 : index
    %c0_4 = arith.constant 0 : index
    %c0_5 = arith.constant 0 : index
    %3 = vector.load %arg5[%c0_3, %c0_4, %c0_5] : memref<1x1x256xf32, #tpu.memory_space<vmem>>, vector<1x1x256xf32>
    %4 = vector.shape_cast %3 : vector<1x1x256xf32> to vector<1x256xf32>
    %5 = vector.broadcast %0 : f32 to vector<1x256xf32>
    %6 = arith.mulf %5, %4 : vector<1x256xf32>
    %7 = vector.broadcast %6 : vector<1x256xf32> to vector<4x256xf32>
    %8 = arith.addf %2, %7 : vector<4x256xf32>
    %c0_6 = arith.constant 0 : index
    %c0_7 = arith.constant 0 : index
    %c0_8 = arith.constant 0 : index
    %9 = vector.load %arg6[%c0_6, %c0_7, %c0_8] : memref<1x4x256xf32, #tpu.memory_space<vmem>>, vector<1x4x256xf32>
    %10 = vector.shape_cast %9 : vector<1x4x256xf32> to vector<4x256xf32>
    %11 = vector.shape_cast %8 : vector<4x256xf32> to vector<1x4x256xf32>
    tpu.vector_store %arg6[%c0_6, %c0_7, %c0_8], %11 {strides = array<i32>} : memref<1x4x256xf32, #tpu.memory_space<vmem>>, vector<1x4x256xf32>,
    return
  }
  func.func @transform_0(%arg0: i32, %arg1: i32, %arg2: i32) -> i32 {
    %c0_i32 = arith.constant 0 : i32
    %c0_i32_0 = arith.constant 0 : i32
    return %c0_i32 : i32
  }
  func.func @transform_1(%arg0: i32, %arg1: i32, %arg2: i32) -> (i32, i32, i32) {
    %c0_i32 = arith.constant 0 : i32
    return %arg0, %arg1, %arg2 : i32, i32, i32
  }
  func.func @transform_2(%arg0: i32, %arg1: i32, %arg2: i32) -> (i32, i32, i32) {
    %c0_i32 = arith.constant 0 : i32
    %c0_i32_0 = arith.constant 0 : i32
    return %arg0, %c0_i32, %arg2 : i32, i32, i32
  }
  func.func @transform_3(%arg0: i32, %arg1: i32, %arg2: i32) -> (i32, i32, i32) {
    %c0_i32 = arith.constant 0 : i32
    return %arg0, %arg1, %arg2 : i32, i32, i32
  }
}

</mosaic_0001>

<llo_original>
// kernel: tpu_custom_call.1
$region0: #{tpu_custom_call.1}
  #allocation0 [shape = 'u32[]', space=smem, size = 0x4, offset = 0x4, fixed_abs, tag = 'smem constant byte address 0x4 - core index']
  #allocation1 [shape = 'u32[72,128]{1,0:T(1,128)}', space=vmem, size = 0x9000, scoped, tag = 'internal scratch']
  #allocation2 [shape = 'f32[1]{0:T(128)S(6)}', space=smem, size = 0x200, scoped, tag = 'scoped memory for tpu_custom_call.1']
  %s0 = inlined_call_operand.<no memory space> [shape: f32[1], index: 0, kind: input, shape index: {}]
  %s1 = inlined_call_operand.hbm [shape: f32[2,4,256], index: 1, kind: input, shape index: {}]
  %s2 = inlined_call_operand.hbm [shape: f32[2,1,256], index: 2, kind: input, shape index: {}]
  %s3 = inlined_call_operand.hbm [shape: f32[2,4,256], index: 3, kind: output, shape index: {}]
  %s4 = sld [smem:[#allocation0]]
  $region53: #{tpu_custom_call.1} parent=0
    _
  %s6 = ssub.s32 1, %s4
  %s7 = scalar_select 0, %s6, %s4
  %8 = sst [smem:[#allocation2]] %s0
  $region1: #{tpu_custom_call.1} parent=0
    #allocation3 [shape = 'u8[8192]{0}', space=vmem, size = 0x2000, scoped, tag = 'input window, operand 1']
    #allocation4 [shape = 's32[2]{0}', space=sflag, size = 0x8, scoped, tag = 'scoped memory for tpu_custom_call.1']
    #allocation5 [shape = 's32[2]{0}', space=sflag, size = 0x8, scoped, tag = 'scoped memory for tpu_custom_call.1']
    #allocation6 [shape = 'u8[2048]{0}', space=vmem, size = 0x800, scoped, tag = 'input window, operand 2']
    #allocation7 [shape = 's32[2]{0}', space=sflag, size = 0x8, scoped, tag = 'scoped memory for tpu_custom_call.1']
    #allocation8 [shape = 'u8[8192]{0}', space=vmem, size = 0x2000, scoped, tag = 'output window, operand 0']
    %9 = vsyncpa [#allocation4], 0
    %s10 = scalar_lea.sflag [#allocation4], 1
    %11 = vsyncpa %s10, 0
    %12 = vsyncpa [#allocation7], 0
    %s13 = scalar_lea.sflag [#allocation7], 1
    %14 = vsyncpa %s13, 0
    %15 = vsyncpa [#allocation5], 0
    %s16 = scalar_lea.sflag [#allocation5], 1
    %17 = vsyncpa %s16, 0
    loop: start=0, step=1, limit=4
    $region2: #{tpu_custom_call.1} parent=1 // loop_pre_header
      _
    $region3: #{tpu_custom_call.1} parent=1 // loop_header
      %s19 = sphi 0, %s23
      %p20 = scmp.ge.s32.totalorder %s19, 4
      %s26 = sphi 0, %s45
      %s27 = sphi 0, %s41
      %s28 = sphi 0, %s37
      %s29 = sphi 0, %s26
      %s30 = sphi 0, %s27
      %s31 = sphi 0, %s28
      %s32 = sphi 0, %s29
      %s33 = sphi 0, %s30
      %s34 = sphi 0, %s31
      %s46 = sphi 0, %s46
      %s48 = sphi 0, %s46
      %s49 = sphi 0, %s48
      %s63 = sphi 0, %s49
      %s73 = sphi 0, %s75
      %s76 = sphi 0, %s73
      %s77 = sphi 0, %s76
      %s93 = sphi 0, %s77
      %s101 = sphi 0, %s103
      %s104 = sphi 0, %s101
      %s105 = sphi 0, %s104
      %s121 = sphi 0, %s105
      %s131 = sphi 0, %s133
      %s134 = sphi 0, %s131
      %s135 = sphi 0, %s134
      %s151 = sphi 0, %s135
    $region4: #{tpu_custom_call.1} parent=1 // loop_header_branch
      %22 = sbr.rel (%p20) target = $region8
    $region5: #{tpu_custom_call.1} parent=1 // loop_body
      %s24 = ssub.s32 %s19, 1
      %s25 = ssub.s32 %s19, 2
      %s35 = sadd.s32 1, %s28
      %p36 = scmp.ge.s32.totalorder %s35, 1
      %s37 = scalar_select %p36, 0, %s35
      %s38 = sadd.s32 1, %s27
      %s39 = scalar_select %p36, %s38, %s27
      %p40 = scmp.ge.s32.totalorder %s39, 1
      %s41 = scalar_select %p40, 0, %s39
      %s42 = sadd.s32 1, %s26
      %s43 = scalar_select %p40, %s42, %s26
      %p44 = scmp.ge.s32.totalorder %s43, 2
      %s45 = scalar_select %p44, 0, %s43
      %s47 = sadd.s32 %s46, 1
      %p50 = scmp.eq.s32.totalorder %s19, 1
      %p51 = scmp.ne.s32.totalorder %s46, %s48
      %p52 = scmp.eq.s32.totalorder %s19, 0
      %p53 = por %p51, %p52
      %p54 = scmp.ne.s32.totalorder %s46, %s48
      %p55 = scmp.eq.s32.totalorder %s24, 1
      %p56 = por %p54, %p55
      %p57 = scmp.ne.s32.totalorder %s48, %s49
      %p58 = scmp.eq.s32.totalorder %s24, 0
      %p59 = por %p57, %p58
      %p60 = scmp.ne.s32.totalorder %s48, %s49
      %p61 = scmp.eq.s32.totalorder %s25, 1
      %p62 = por %p60, %p61
      %p64 = scmp.ne.s32.totalorder %s49, %s63
      %p65 = scmp.eq.s32.totalorder %s25, 0
      %p66 = por %p64, %p65
      %s67 = ssub.s32 %s26, %s45
      %s68 = ssub.s32 %s27, %s41
      %s69 = sor.u32 %s67, %s68
      %s70 = ssub.s32 %s28, %s37
      %s71 = sor.u32 %s69, %s70
      %p72 = scmp.eq.s32.totalorder %s71, 0
      %s74 = sadd.s32 %s73, 1
      %s75 = scalar_select %p72, %s73, %s74
      %p78 = pneg %p72
      %p79 = scmp.eq.s32.totalorder %s19, 1
      %p80 = por %p78, %p79
      %p81 = scmp.ne.s32.totalorder %s73, %s76
      %p82 = scmp.eq.s32.totalorder %s19, 0
      %p83 = por %p81, %p82
      %p84 = scmp.ne.s32.totalorder %s73, %s76
      %p85 = scmp.eq.s32.totalorder %s24, 1
      %p86 = por %p84, %p85
      %p87 = scmp.ne.s32.totalorder %s76, %s77
      %p88 = scmp.eq.s32.totalorder %s24, 0
      %p89 = por %p87, %p88
      %p90 = scmp.ne.s32.totalorder %s76, %s77
      %p91 = scmp.eq.s32.totalorder %s25, 1
      %p92 = por %p90, %p91
      %p94 = scmp.ne.s32.totalorder %s77, %s93
      %p95 = scmp.eq.s32.totalorder %s25, 0
      %p96 = por %p94, %p95
      %s97 = ssub.s32 %s26, %s45
      %s98 = ssub.s32 %s28, %s37
      %s99 = sor.u32 %s97, %s98
      %p100 = scmp.eq.s32.totalorder %s99, 0
      %s102 = sadd.s32 %s101, 1
      %s103 = scalar_select %p100, %s101, %s102
      %p106 = pneg %p100
      %p107 = scmp.eq.s32.totalorder %s19, 1
      %p108 = por %p106, %p107
      %p109 = scmp.ne.s32.totalorder %s101, %s104
      %p110 = scmp.eq.s32.totalorder %s19, 0
      %p111 = por %p109, %p110
      %p112 = scmp.ne.s32.totalorder %s101, %s104
      %p113 = scmp.eq.s32.totalorder %s24, 1
      %p114 = por %p112, %p113
      %p115 = scmp.ne.s32.totalorder %s104, %s105
      %p116 = scmp.eq.s32.totalorder %s24, 0
      %p117 = por %p115, %p116
      %p118 = scmp.ne.s32.totalorder %s104, %s105
      %p119 = scmp.eq.s32.totalorder %s25, 1
      %p120 = por %p118, %p119
      %p122 = scmp.ne.s32.totalorder %s105, %s121
      %p123 = scmp.eq.s32.totalorder %s25, 0
      %p124 = por %p122, %p123
      %s125 = ssub.s32 %s26, %s45
      %s126 = ssub.s32 %s27, %s41
      %s127 = sor.u32 %s125, %s126
      %s128 = ssub.s32 %s28, %s37
      %s129 = sor.u32 %s127, %s128
      %p130 = scmp.eq.s32.totalorder %s129, 0
      %s132 = sadd.s32 %s131, 1
      %s133 = scalar_select %p130, %s131, %s132
      %p136 = pneg %p130
      %p137 = scmp.eq.s32.totalorder %s19, 1
      %p138 = por %p136, %p137
      %p139 = scmp.ne.s32.totalorder %s131, %s134
      %p140 = scmp.eq.s32.totalorder %s19, 0
      %p141 = por %p139, %p140
      %p142 = scmp.ne.s32.totalorder %s131, %s134
      %p143 = scmp.eq.s32.totalorder %s24, 1
      %p144 = por %p142, %p143
      %p145 = scmp.ne.s32.totalorder %s134, %s135
      %p146 = scmp.eq.s32.totalorder %s24, 0
      %p147 = por %p145, %p146
      %p148 = scmp.ne.s32.totalorder %s134, %s135
      %p149 = scmp.eq.s32.totalorder %s25, 1
      %p150 = por %p148, %p149
      %p152 = scmp.ne.s32.totalorder %s135, %s151
      %p153 = scmp.eq.s32.totalorder %s25, 0
      %p154 = por %p152, %p153
      %p155 = scmp.le.s32.totalorder 1, %s19
      %p156 = scmp.lt.s32.totalorder %s19, 3
      %p157 = pnand %p155, %p156
      %p158 = pneg %p157
      // Predicated region
      $region9: #{tpu_custom_call.1} parent=5 // pred_check
        _
      $region10: #{tpu_custom_call.1} parent=5 // pred_check_branch
        %160 = sbr.rel (%p157) target = $region12
      $region11: #{tpu_custom_call.1} parent=5 // pred_region
        %s161 = ssub.s32 %s19, 1
        // Predicated region
        $region13: #{tpu_custom_call.1} parent=11 // pred_check
          %p162 = pneg %p59
        $region14: #{tpu_custom_call.1} parent=11 // pred_check_branch
          %164 = sbr.rel (%p162) target = $region16
        $region15: #{tpu_custom_call.1} parent=11 // pred_region
          _
        $region16: #{tpu_custom_call.1} parent=11 // pred_fallthru
          _
      $region12: #{tpu_custom_call.1} parent=5 // pred_fallthru
        _
      %p165 = scmp.lt.s32.totalorder %s19, 2
      // Predicated region
      $region17: #{tpu_custom_call.1} parent=5 // pred_check
        %p166 = pneg %p165
      $region18: #{tpu_custom_call.1} parent=5 // pred_check_branch
        %168 = sbr.rel (%p166) target = $region20
      $region19: #{tpu_custom_call.1} parent=5 // pred_region
        // Predicated region
        $region21: #{tpu_custom_call.1} parent=19 // pred_check
          %p169 = pneg %p83
        $region22: #{tpu_custom_call.1} parent=19 // pred_check_branch
          %171 = sbr.rel (%p169) target = $region24
        $region23: #{tpu_custom_call.1} parent=19 // pred_region
          %s172 = sand.u32 %s73, 1
          %s173 = scalar_lea.sflag [#allocation4], %s172
          %s174 = sand.u32 %s73, 1
          %s175 = smul.addr %s174, 8
          %s176 = scalar_lea.vmem [#allocation3], %s175
          %s177 = smul.u32 2, %s28
          %179 = vsyncadd %s173, 0
          %s180 = smul.addr %s27, 2
          %s181 = sadd.s32 %s177, %s180
          %s182 = smul.addr %s26, 2
          %s183 = sadd.s32 %s181, %s182
          %s184 = smul.addr %s183, 4
          %s185 = scalar_lea.hbm %s1, %s184
          %s187 = sshll.u32 %s185, 4
          %s188 = int_to_ptr.hbm [resolvable:$true] %s187
          %s189 = sshll.u32 %s176, 4
          %s190 = int_to_ptr.vmem [resolvable:$true] %s189
          %192 = dma.hbm_to_vmem [thread:$0]  %s188, 128, %s190, %s173
        $region24: #{tpu_custom_call.1} parent=19 // pred_fallthru
          _
        // Predicated region
        $region25: #{tpu_custom_call.1} parent=19 // pred_check
          %p193 = pneg %p111
        $region26: #{tpu_custom_call.1} parent=19 // pred_check_branch
          %195 = sbr.rel (%p193) target = $region28
        $region27: #{tpu_custom_call.1} parent=19 // pred_region
          %s196 = sand.u32 %s101, 1
          %s197 = scalar_lea.sflag [#allocation7], %s196
          %s198 = sand.u32 %s101, 1
          %s199 = smul.addr %s198, 2
          %s200 = scalar_lea.vmem [#allocation6], %s199
          %s201 = smul.u32 2, %s28
          %203 = vsyncadd %s197, 0
          %s204 = smul.addr %s26, 2
          %s205 = sadd.s32 %s201, %s204
          %s206 = scalar_lea.hbm %s2, %s205
          %s208 = sshll.u32 %s206, 4
          %s209 = int_to_ptr.hbm [resolvable:$true] %s208
          %s210 = sshll.u32 %s200, 4
          %s211 = int_to_ptr.vmem [resolvable:$true] %s210
          %213 = dma.hbm_to_vmem [thread:$0]  %s209, 32, %s211, %s197
        $region28: #{tpu_custom_call.1} parent=19 // pred_fallthru
          _
      $region20: #{tpu_custom_call.1} parent=5 // pred_fallthru
        _
      %p214 = scmp.le.s32.totalorder 1, %s19
      %p215 = scmp.lt.s32.totalorder %s19, 3
      %p216 = pnand %p214, %p215
      %p217 = pneg %p216
      // Predicated region
      $region29: #{tpu_custom_call.1} parent=5 // pred_check
        _
      $region30: #{tpu_custom_call.1} parent=5 // pred_check_branch
        %219 = sbr.rel (%p216) target = $region32
      $region31: #{tpu_custom_call.1} parent=5 // pred_region
        %s220 = ssub.s32 %s19, 1
        %s221 = sand.u32 %s76, 1
        %s222 = scalar_lea.sflag [#allocation4], %s221
        %s223 = sand.u32 %s76, 1
        %s224 = smul.addr %s223, 8
        %s225 = scalar_lea.vmem [#allocation3], %s224
        // Predicated region
        $region33: #{tpu_custom_call.1} parent=31 // pred_check
          %p226 = pneg %p89
        $region34: #{tpu_custom_call.1} parent=31 // pred_check_branch
          %228 = sbr.rel (%p226) target = $region36
        $region35: #{tpu_custom_call.1} parent=31 // pred_region
          %230 = dma.done %s222, 128
        $region36: #{tpu_custom_call.1} parent=31 // pred_fallthru
          _
        %s231 = sand.u32 %s104, 1
        %s232 = scalar_lea.sflag [#allocation7], %s231
        %s233 = sand.u32 %s104, 1
        %s234 = smul.addr %s233, 2
        %s235 = scalar_lea.vmem [#allocation6], %s234
        // Predicated region
        $region37: #{tpu_custom_call.1} parent=31 // pred_check
          %p236 = pneg %p117
        $region38: #{tpu_custom_call.1} parent=31 // pred_check_branch
          %238 = sbr.rel (%p236) target = $region40
        $region39: #{tpu_custom_call.1} parent=31 // pred_region
          %240 = dma.done %s232, 32
        $region40: #{tpu_custom_call.1} parent=31 // pred_fallthru
          _
        %p241 = pneg %p59
        %p242 = pneg %p56
        %s243 = sand.u32 %s76, 1
        %s244 = scalar_lea.sflag [#allocation4], %s243
        %s245 = sand.u32 %s76, 1
        %s246 = smul.addr %s245, 8
        %s247 = scalar_lea.vmem [#allocation3], %s246
        %p248 = pneg %p89
        %p249 = pneg %p86
        %s250 = sand.u32 %s104, 1
        %s251 = scalar_lea.sflag [#allocation7], %s250
        %s252 = sand.u32 %s104, 1
        %s253 = smul.addr %s252, 2
        %s254 = scalar_lea.vmem [#allocation6], %s253
        %p255 = pneg %p117
        %p256 = pneg %p114
        %p257 = pneg %p147
        %p258 = pneg %p144
        %s259 = sand.u32 %s134, 1
        %s260 = scalar_lea.sflag [#allocation5], %s259
        %s261 = sand.u32 %s134, 1
        %s262 = smul.addr %s261, 8
        %s263 = scalar_lea.vmem [#allocation8], %s262
        %s264 = smul.u32 2, %s31
        %s265 = smul.u32 2, %s31
        %s266 = smul.u32 2, %s31
        %s267 = sld [smem:[#allocation2]]
        %v268 = vld [vmem:[%s225] sm:$0xff]
        %v269 = vld [vmem:[%s235] sm:$0x3]
        %v270 = vstv %s267
        %v271 = vmul.f32 %v270, %v269
        %v273 = vperm.slane %v271, 0
        %v274 = vperm.slane %v271, 1
        %v275 = vrot.slane %v274, 4
        %vm276 = vcmask 1043456
        %v277 = vsel %vm276, %v273, %v275
        %v279 = vadd.f32 %v268, %v277
        %280 = vst [vmem:[%s263] sm:$0xff] %v279
        %s281 = sand.u32 %s134, 1
        %s282 = scalar_lea.sflag [#allocation5], %s281
        %s283 = sand.u32 %s134, 1
        %s284 = smul.addr %s283, 8
        %s285 = scalar_lea.vmem [#allocation8], %s284
        // Predicated region
        $region41: #{tpu_custom_call.1} parent=31 // pred_check
          %p286 = pneg %p144
        $region42: #{tpu_custom_call.1} parent=31 // pred_check_branch
          %288 = sbr.rel (%p286) target = $region44
        $region43: #{tpu_custom_call.1} parent=31 // pred_region
          %s289 = smul.u32 2, %s31
          %291 = vsyncadd %s282, 0
          %s292 = smul.addr %s30, 2
          %s293 = sadd.s32 %s289, %s292
          %s294 = smul.addr %s29, 2
          %s295 = sadd.s32 %s293, %s294
          %s296 = smul.addr %s295, 4
          %s297 = scalar_lea.hbm %s3, %s296
          %s299 = sshll.u32 %s285, 4
          %s300 = int_to_ptr.vmem [resolvable:$true] %s299
          %s301 = sshll.u32 %s297, 4
          %s302 = int_to_ptr.hbm [resolvable:$true] %s301
          %304 = dma.vmem_to_hbm [thread:$0]  %s300, 128, %s302, %s282
        $region44: #{tpu_custom_call.1} parent=31 // pred_fallthru
          _
      $region32: #{tpu_custom_call.1} parent=5 // pred_fallthru
        _
      %p305 = scmp.le.s32.totalorder 2, %s19
      // Predicated region
      $region45: #{tpu_custom_call.1} parent=5 // pred_check
        %p306 = pneg %p305
      $region46: #{tpu_custom_call.1} parent=5 // pred_check_branch
        %308 = sbr.rel (%p306) target = $region48
      $region47: #{tpu_custom_call.1} parent=5 // pred_region
        %s309 = ssub.s32 %s19, 2
        // Predicated region
        $region49: #{tpu_custom_call.1} parent=47 // pred_check
          %p310 = pneg %p150
        $region50: #{tpu_custom_call.1} parent=47 // pred_check_branch
          %312 = sbr.rel (%p310) target = $region52
        $region51: #{tpu_custom_call.1} parent=47 // pred_region
          %s313 = sand.u32 %s135, 1
          %s314 = scalar_lea.sflag [#allocation5], %s313
          %s315 = sand.u32 %s135, 1
          %s316 = smul.addr %s315, 8
          %s317 = scalar_lea.vmem [#allocation8], %s316
          %319 = dma.done %s314, 128
        $region52: #{tpu_custom_call.1} parent=47 // pred_fallthru
          _
      $region48: #{tpu_custom_call.1} parent=5 // pred_fallthru
        _
    $region6: #{tpu_custom_call.1} parent=1 // loop_footer
      %s23 = sadd.s32 1, %s19
    $region7: #{tpu_custom_call.1} parent=1 // loop_footer_branch
      %18 = sbr.rel target = $region3
    $region8: #{tpu_custom_call.1} parent=1 // loop_exit
      _
    %320 = vsyncpa [#allocation4], 1
    %s321 = scalar_lea.sflag [#allocation4], 1
    %322 = vsyncpa %s321, 1
    %323 = vsyncpa [#allocation7], 1
    %s324 = scalar_lea.sflag [#allocation7], 1
    %325 = vsyncpa %s324, 1
    %326 = vsyncpa [#allocation5], 1
    %s327 = scalar_lea.sflag [#allocation5], 1
    %328 = vsyncpa %s327, 1

</llo_original>
